<compile_context>
chip_gen: v7x
topology: tpu7x:2x2x1
jax: 0.10.0
libtpu: 0.0.40
codegen_flags: <defaults>
</compile_context>

<pallas_src>
import functools
import math

import jax
import jax.numpy as jnp
from jax.experimental import pallas as pl
from jax.experimental.pallas import tpu as pltpu


def _grapher_kernel(x_ref, adj_ref, w_ref, b_ref, o_ref, *, adj_first):
    # x_ref:   (TB, N, Din)     batch tile (input dtype; cast in-kernel)
    # adj_ref: (N, N)           normalized adjacency adj / (rowsum + 1), compute dtype
    # w_ref:   (Din, Dout_p)    weight, output features zero-padded to a multiple of 128
    # b_ref:   (1, Dout_p)      bias, f32, zero-padded
    # o_ref:   (TB, N, Dout_p)  lane-dense output tile
    adj = adj_ref[...]
    w = w_ref[...]
    cdt = adj.dtype
    n = x_ref.shape[1]
    dout_p = w_ref.shape[1]
    # Hoist the bias broadcast out of the per-batch loop (broadcasts are not CSE'd).
    bias = jnp.broadcast_to(b_ref[...], (n, dout_p))            # f32

    for b in range(x_ref.shape[0]):                             # static unroll over TB
        xb = x_ref[b].astype(cdt)                               # (N, Din)
        if adj_first:
            # (adj @ x_b) @ W : adjacency contracted against the cheaper Din dim.
            ax = jnp.dot(adj, xb, preferred_element_type=jnp.float32)        # (N, Din) f32
            out = jnp.dot(ax.astype(cdt), w, preferred_element_type=jnp.float32)
        else:
            # adj @ (x_b @ W) : better when Din > Dout_p.
            h = jnp.dot(xb, w, preferred_element_type=jnp.float32)           # (N, Dout_p) f32
            out = jnp.dot(adj, h.astype(cdt), preferred_element_type=jnp.float32)
        # f32 epilogue (bias add + ReLU), then cast for the store.
        o_ref[b] = jnp.maximum(out + bias, 0.0).astype(o_ref.dtype)


def _vmem_capacity_bytes():
    """Per-generation VMEM capacity (v5e/v6e: 128 MiB, v7x: 64 MiB per TC)."""
    try:
        info = pltpu.get_tpu_info()
        cap = int(getattr(info, "vmem_capacity_bytes", 0) or 0)
        if cap > 0:
            return cap
    except Exception:
        pass
    return 64 * 1024 * 1024  # conservative fallback = smallest (v7x per-TC)


def grapher_forward(x, adj, weight, bias, *,
                    compute_dtype=jnp.bfloat16,   # bf16 MXU fast path is the default
                    out_dtype=jnp.float32,
                    rows_per_step=512):
    """x: (B, N, Din), adj: (N, N), weight: (Din, Dout), bias: (Dout,) -> (B, N, Dout)."""
    B, N, Din = x.shape
    Dout = weight.shape[1]

    # ---- hoisted work, done ONCE (not per grid step) -------------------------
    # GCN normalization: (adj @ h) / (rowsum + 1) == (adj / (rowsum + 1)) @ h
    denom = jnp.sum(adj, axis=1, keepdims=True) + 1.0
    adj_norm = (adj / denom).astype(compute_dtype)               # (N, N)

    # Lane-dense output features; skip the pad/slice round trip when Dout is
    # already a multiple of 128.
    Dout_p = ((Dout + 127) // 128) * 128
    w_c = weight.astype(compute_dtype)                           # (Din, Dout_p)
    b_c = bias.astype(jnp.float32).reshape(1, Dout)              # (1, Dout_p) f32
    if Dout_p != Dout:
        w_c = jnp.pad(w_c, ((0, 0), (0, Dout_p - Dout)))
        b_c = jnp.pad(b_c, ((0, 0), (0, Dout_p - Dout)))

    # Static matmul-order choice: contract adjacency against the smaller feature dim.
    adj_first = Din <= Dout_p

    # ---- per-generation VMEM budget & batch-tile selection --------------------
    vmem_cap = _vmem_capacity_bytes()
    vmem_limit = int(max(16 * 2**20, min(vmem_cap * 3 // 4, 64 * 2**20)))

    sz_x = jnp.dtype(x.dtype).itemsize
    sz_c = jnp.dtype(compute_dtype).itemsize
    sz_o = jnp.dtype(out_dtype).itemsize

    TB = max(1, min(B, max(1, rows_per_step // max(N, 1))))      # ~rows_per_step rows/step
    if B >= 2:
        TB = min(TB, (B + 1) // 2)   # >= 2 grid steps -> real work for v7x's 2 TCs
    TB = min(TB, 32)                 # bound static unrolling of the in-kernel batch loop

    consts = (N * N + Din * Dout_p) * sz_c + Dout_p * 4
    def _working_set(tb):
        # x/out tiles double-buffered by the pipeline; constants counted twice in
        # case single-buffering (pl.Buffered(1)) is unavailable on this jax.
        return 2 * tb * N * (Din * sz_x + Dout_p * sz_o) + 2 * consts
    while TB > 1 and _working_set(TB) > int(0.8 * vmem_limit):
        TB -= 1
    while B % TB:                    # exact grid: no padded batch rows, no wrapper slice
        TB -= 1

    kernel = functools.partial(_grapher_kernel, adj_first=adj_first)

    def _call(single_buffer_consts):
        # Grid constants (adj_norm, W, bias) never change block index; single-buffer
        # them so they don't pay 2x VMEM for double buffering.
        cmode = {"pipeline_mode": pl.Buffered(1)} if single_buffer_consts else {}
        return pl.pallas_call(
            kernel,
            out_shape=jax.ShapeDtypeStruct((B, N, Dout_p), out_dtype),
            grid=(B // TB,),
            in_specs=[
                pl.BlockSpec((TB, N, Din), lambda i: (i, 0, 0)),          # x batch tile
                pl.BlockSpec((N, N), lambda i: (0, 0), **cmode),          # adj_norm (constant)
                pl.BlockSpec((Din, Dout_p), lambda i: (0, 0), **cmode),   # weight  (constant)
                pl.BlockSpec((1, Dout_p), lambda i: (0, 0), **cmode),     # bias    (constant)
            ],
            out_specs=pl.BlockSpec((TB, N, Dout_p), lambda i: (i, 0, 0)),
            compiler_params=pltpu.CompilerParams(
                # Independent batch tiles; on v7x an explicit CORE_PARALLEL /
                # core_map split of this axis would pin tiles to the 2 TCs.
                dimension_semantics=("parallel",),
                vmem_limit_bytes=vmem_limit,
            ),
        )(x, adj_norm, w_c, b_c)

    try:
        out = _call(True)
    except Exception:
        # pipeline_mode=pl.Buffered(1) unsupported on this jax version -> plain specs.
        out = _call(False)

    if Dout_p != Dout:
        out = out[..., :Dout]
    return out


def reference_forward(x, adj, weight, bias):
    hidden = jnp.einsum("bnd,de->bne", x, weight)
    denom = jnp.sum(adj, axis=1, keepdims=True) + 1.0
    out = jnp.einsum("nm,bme->bne", adj, hidden) / denom
    out = out + bias
    return jnp.maximum(out, 0.0)


def _make_adj(key, n):
    # TODO(synk): real adjacency comes from a spaCy dependency parse
    # (Grapher.gen_adj / dependency_adj_matrix); build a deterministic
    # symmetric 0/1 adjacency with self-loops instead.
    raw = (jax.random.uniform(key, (n, n)) > 0.7).astype(jnp.float32)
    a = jnp.clip(raw + raw.T, 0.0, 1.0)
    return jnp.maximum(a, jnp.eye(n, dtype=jnp.float32))


if __name__ == "__main__":
    # Small shapes consistent with the module's forward:
    # batch B=2, seq/nodes N=8, in_features=32, out_features=32.
    B, N, Din, Dout = 2, 8, 32, 32

    key = jax.random.PRNGKey(0)
    keys = jax.random.split(key, 8)

    x = jax.random.normal(keys[0], (B, N, Din), dtype=jnp.float32)
    adj = _make_adj(keys[1], N)

    # GCN.reset_parameters: uniform(-stdv, stdv), stdv = 1/sqrt(out_features)
    stdv = 1.0 / math.sqrt(Dout)
    weight = jax.random.uniform(keys[2], (Din, Dout), minval=-stdv, maxval=stdv,
                                dtype=jnp.float32)
    bias = jax.random.uniform(keys[3], (Dout,), minval=-stdv, maxval=stdv,
                              dtype=jnp.float32)

    ref = reference_forward(x, adj, weight, bias)

    # f32 parity path (only difference vs PyTorch is the (adj@x)@W reassociation).
    out_f32 = jax.block_until_ready(
        grapher_forward(x, adj, weight, bias, compute_dtype=jnp.float32))
    assert out_f32.shape == (B, N, Dout)
    assert jnp.allclose(out_f32, ref, atol=1e-4, rtol=1e-4)

    # Default bf16 compute path (f32 accumulation + f32 epilogue): loose check.
    out_bf16 = jax.block_until_ready(grapher_forward(x, adj, weight, bias))
    assert out_bf16.shape == (B, N, Dout)
    assert float(jnp.max(jnp.abs(out_bf16 - ref))) < 0.1

    # Second config exercising the Din > Dout_p branch (adj @ (x @ W)) and an
    # odd batch size (TB divisor logic, 3 grid steps).
    B2, N2, Din2, Dout2 = 3, 8, 160, 32
    x2 = jax.random.normal(keys[4], (B2, N2, Din2), dtype=jnp.float32)
    w2 = jax.random.uniform(keys[5], (Din2, Dout2), minval=-stdv, maxval=stdv,
                            dtype=jnp.float32)
    b2 = jax.random.uniform(keys[6], (Dout2,), minval=-stdv, maxval=stdv,
                            dtype=jnp.float32)
    adj2 = _make_adj(keys[7], N2)
    ref2 = reference_forward(x2, adj2, w2, b2)
    out2 = jax.block_until_ready(
        grapher_forward(x2, adj2, w2, b2, compute_dtype=jnp.float32))
    assert out2.shape == (B2, N2, Dout2)
    assert jnp.allclose(out2, ref2, atol=1e-4, rtol=1e-4)

    print("KERNEL_OK")
</pallas_src>

<mosaic_0001>
module attributes {stable_mosaic.version = 11 : i64} {
  func.func @_grapher_kernel(%arg0: i32, %arg1: memref<1x8x32xf32, #tpu.memory_space<vmem>>, %arg2: memref<8x8xf32, #tpu.memory_space<vmem>>, %arg3: memref<32x128xf32, #tpu.memory_space<vmem>>, %arg4: memref<1x128xf32, #tpu.memory_space<vmem>>, %arg5: memref<1x8x128xf32, #tpu.memory_space<vmem>>) attributes {dimension_semantics = [#tpu.dimension_semantics<parallel>], iteration_bounds = array<i64: 2>, scalar_prefetch = 0 : i64, scratch_operands = 0 : i64, tpu.core_type = #tpu.core_type<tc>, window_params = [{transform_indices = @transform_0, window_bounds = array<i64: 1, 8, 32>}, {pipeline_mode = #tpu.pipeline_mode<synchronous>, transform_indices = @transform_1, window_bounds = array<i64: 8, 8>}, {pipeline_mode = #tpu.pipeline_mode<synchronous>, transform_indices = @transform_2, window_bounds = array<i64: 32, 128>}, {pipeline_mode = #tpu.pipeline_mode<synchronous>, transform_indices = @transform_3, window_bounds = array<i64: 1, 128>}, {transform_indices = @transform_4, window_bounds = array<i64: 1, 8, 128>}]} {
    %c0 = arith.constant 0 : index
    %c0_0 = arith.constant 0 : index
    %0 = vector.load %arg2[%c0, %c0_0] : memref<8x8xf32, #tpu.memory_space<vmem>>, vector<8x8xf32>
    %c0_1 = arith.constant 0 : index
    %c0_2 = arith.constant 0 : index
    %1 = vector.load %arg3[%c0_1, %c0_2] : memref<32x128xf32, #tpu.memory_space<vmem>>, vector<32x128xf32>
    %c0_3 = arith.constant 0 : index
    %c0_4 = arith.constant 0 : index
    %2 = vector.load %arg4[%c0_3, %c0_4] : memref<1x128xf32, #tpu.memory_space<vmem>>, vector<1x128xf32>
    %3 = vector.shape_cast %2 : vector<1x128xf32> to vector<1x128xf32>
    %4 = vector.broadcast %3 : vector<1x128xf32> to vector<8x128xf32>
    %c0_5 = arith.constant 0 : index
    %c0_6 = arith.constant 0 : index
    %c0_7 = arith.constant 0 : index
    %5 = vector.load %arg1[%c0_5, %c0_6, %c0_7] : memref<1x8x32xf32, #tpu.memory_space<vmem>>, vector<1x8x32xf32>
    %6 = vector.shape_cast %5 : vector<1x8x32xf32> to vector<8x32xf32>
    %cst = arith.constant dense<0.000000e+00> : vector<8x32xf32>
    %7 = tpu.matmul %0, %6, %cst {dimension_numbers = #tpu.dot_dimension_numbers<[1], [0], [0], [1], [0, 0, 1, 1], [], []>} : vector<8x8xf32>, vector<8x32xf32>, vector<8x32xf32> -> vector<8x32xf32>
    %cst_8 = arith.constant dense<0.000000e+00> : vector<8x128xf32>
    %8 = tpu.matmul %7, %1, %cst_8 {dimension_numbers = #tpu.dot_dimension_numbers<[1], [0], [0], [1], [0, 0, 1, 1], [], []>} : vector<8x32xf32>, vector<32x128xf32>, vector<8x128xf32> -> vector<8x128xf32>
    %9 = arith.addf %8, %4 : vector<8x128xf32>
    %cst_9 = arith.constant 0.000000e+00 : f32
    %10 = vector.broadcast %cst_9 : f32 to vector<8x128xf32>
    %11 = arith.maximumf %9, %10 : vector<8x128xf32>
    %c0_10 = arith.constant 0 : index
    %c0_11 = arith.constant 0 : index
    %c0_12 = arith.constant 0 : index
    %12 = vector.load %arg5[%c0_10, %c0_11, %c0_12] : memref<1x8x128xf32, #tpu.memory_space<vmem>>, vector<1x8x128xf32>
    %13 = vector.shape_cast %12 : vector<1x8x128xf32> to vector<8x128xf32>
    %14 = vector.shape_cast %11 : vector<8x128xf32> to vector<1x8x128xf32>
    tpu.vector_store %arg5[%c0_10, %c0_11, %c0_12], %14 {strides = array<i32>} : memref<1x8x128xf32, #tpu.memory_space<vmem>>, vector<1x8x128xf32>,
    return
  }
  func.func @transform_0(%arg0: i32) -> (i32, i32, i32) {
    %c0_i32 = arith.constant 0 : i32
    %c0_i32_0 = arith.constant 0 : i32
    %c0_i32_1 = arith.constant 0 : i32
    return %arg0, %c0_i32, %c0_i32_0 : i32, i32, i32
  }
  func.func @transform_1(%arg0: i32) -> (i32, i32) {
    %c0_i32 = arith.constant 0 : i32
    %c0_i32_0 = arith.constant 0 : i32
    %c0_i32_1 = arith.constant 0 : i32
    return %c0_i32, %c0_i32_0 : i32, i32
  }
  func.func @transform_2(%arg0: i32) -> (i32, i32) {
    %c0_i32 = arith.constant 0 : i32
    %c0_i32_0 = arith.constant 0 : i32
    %c0_i32_1 = arith.constant 0 : i32
    return %c0_i32, %c0_i32_0 : i32, i32
  }
  func.func @transform_3(%arg0: i32) -> (i32, i32) {
    %c0_i32 = arith.constant 0 : i32
    %c0_i32_0 = arith.constant 0 : i32
    %c0_i32_1 = arith.constant 0 : i32
    return %c0_i32, %c0_i32_0 : i32, i32
  }
  func.func @transform_4(%arg0: i32) -> (i32, i32, i32) {
    %c0_i32 = arith.constant 0 : i32
    %c0_i32_0 = arith.constant 0 : i32
    %c0_i32_1 = arith.constant 0 : i32
    return %arg0, %c0_i32, %c0_i32_0 : i32, i32, i32
  }
}

module attributes {stable_mosaic.version = 11 : i64} {
  func.func @_grapher_kernel(%arg0: i32, %arg1: memref<1x8x32xf32, #tpu.memory_space<vmem>>, %arg2: memref<8x8xf32, #tpu.memory_space<vmem>>, %arg3: memref<32x128xf32, #tpu.memory_space<vmem>>, %arg4: memref<1x128xf32, #tpu.memory_space<vmem>>, %arg5: memref<1x8x128xf32, #tpu.memory_space<vmem>>) attributes {dimension_semantics = [#tpu.dimension_semantics<parallel>], iteration_bounds = array<i64: 2>, scalar_prefetch = 0 : i64, scratch_operands = 0 : i64, tpu.core_type = #tpu.core_type<tc>, window_params = [{transform_indices = @transform_0, window_bounds = array<i64: 1, 8, 32>}, {pipeline_mode = #tpu.pipeline_mode<synchronous>, transform_indices = @transform_1, window_bounds = array<i64: 8, 8>}, {pipeline_mode = #tpu.pipeline_mode<synchronous>, transform_indices = @transform_2, window_bounds = array<i64: 32, 128>}, {pipeline_mode = #tpu.pipeline_mode<synchronous>, transform_indices = @transform_3, window_bounds = array<i64: 1, 128>}, {transform_indices = @transform_4, window_bounds = array<i64: 1, 8, 128>}]} {
    %c0 = arith.constant 0 : index
    %c0_0 = arith.constant 0 : index
    %0 = vector.load %arg2[%c0, %c0_0] : memref<8x8xf32, #tpu.memory_space<vmem>>, vector<8x8xf32>
    %c0_1 = arith.constant 0 : index
    %c0_2 = arith.constant 0 : index
    %1 = vector.load %arg3[%c0_1, %c0_2] : memref<32x128xf32, #tpu.memory_space<vmem>>, vector<32x128xf32>
    %c0_3 = arith.constant 0 : index
    %c0_4 = arith.constant 0 : index
    %2 = vector.load %arg4[%c0_3, %c0_4] : memref<1x128xf32, #tpu.memory_space<vmem>>, vector<1x128xf32>
    %3 = vector.shape_cast %2 : vector<1x128xf32> to vector<1x128xf32>
    %4 = vector.broadcast %3 : vector<1x128xf32> to vector<8x128xf32>
    %c0_5 = arith.constant 0 : index
    %c0_6 = arith.constant 0 : index
    %c0_7 = arith.constant 0 : index
    %5 = vector.load %arg1[%c0_5, %c0_6, %c0_7] : memref<1x8x32xf32, #tpu.memory_space<vmem>>, vector<1x8x32xf32>
    %6 = vector.shape_cast %5 : vector<1x8x32xf32> to vector<8x32xf32>
    %cst = arith.constant dense<0.000000e+00> : vector<8x32xf32>
    %7 = tpu.matmul %0, %6, %cst {dimension_numbers = #tpu.dot_dimension_numbers<[1], [0], [0], [1], [0, 0, 1, 1], [], []>} : vector<8x8xf32>, vector<8x32xf32>, vector<8x32xf32> -> vector<8x32xf32>
    %cst_8 = arith.constant dense<0.000000e+00> : vector<8x128xf32>
    %8 = tpu.matmul %7, %1, %cst_8 {dimension_numbers = #tpu.dot_dimension_numbers<[1], [0], [0], [1], [0, 0, 1, 1], [], []>} : vector<8x32xf32>, vector<32x128xf32>, vector<8x128xf32> -> vector<8x128xf32>
    %9 = arith.addf %8, %4 : vector<8x128xf32>
    %cst_9 = arith.constant 0.000000e+00 : f32
    %10 = vector.broadcast %cst_9 : f32 to vector<8x128xf32>
    %11 = arith.maximumf %9, %10 : vector<8x128xf32>
    %c0_10 = arith.constant 0 : index
    %c0_11 = arith.constant 0 : index
    %c0_12 = arith.constant 0 : index
    %12 = vector.load %arg5[%c0_10, %c0_11, %c0_12] : memref<1x8x128xf32, #tpu.memory_space<vmem>>, vector<1x8x128xf32>
    %13 = vector.shape_cast %12 : vector<1x8x128xf32> to vector<8x128xf32>
    %14 = vector.shape_cast %11 : vector<8x128xf32> to vector<1x8x128xf32>
    tpu.vector_store %arg5[%c0_10, %c0_11, %c0_12], %14 {strides = array<i32>} : memref<1x8x128xf32, #tpu.memory_space<vmem>>, vector<1x8x128xf32>,
    return
  }
  func.func @transform_0(%arg0: i32) -> (i32, i32, i32) {
    %c0_i32 = arith.constant 0 : i32
    %c0_i32_0 = arith.constant 0 : i32
    %c0_i32_1 = arith.constant 0 : i32
    return %arg0, %c0_i32, %c0_i32_0 : i32, i32, i32
  }
  func.func @transform_1(%arg0: i32) -> (i32, i32) {
    %c0_i32 = arith.constant 0 : i32
    %c0_i32_0 = arith.constant 0 : i32
    %c0_i32_1 = arith.constant 0 : i32
    return %c0_i32, %c0_i32_0 : i32, i32
  }
  func.func @transform_2(%arg0: i32) -> (i32, i32) {
    %c0_i32 = arith.constant 0 : i32
    %c0_i32_0 = arith.constant 0 : i32
    %c0_i32_1 = arith.constant 0 : i32
    return %c0_i32, %c0_i32_0 : i32, i32
  }
  func.func @transform_3(%arg0: i32) -> (i32, i32) {
    %c0_i32 = arith.constant 0 : i32
    %c0_i32_0 = arith.constant 0 : i32
    %c0_i32_1 = arith.constant 0 : i32
    return %c0_i32, %c0_i32_0 : i32, i32
  }
  func.func @transform_4(%arg0: i32) -> (i32, i32, i32) {
    %c0_i32 = arith.constant 0 : i32
    %c0_i32_0 = arith.constant 0 : i32
    %c0_i32_1 = arith.constant 0 : i32
    return %arg0, %c0_i32, %c0_i32_0 : i32, i32, i32
  }
}

</mosaic_0001>

<llo_original>
// kernel: tpu_custom_call.1
$region0: #{tpu_custom_call.1}
  #allocation0 [shape = 'u32[]', space=smem, size = 0x4, offset = 0x4, fixed_abs, tag = 'smem constant byte address 0x4 - core index']
  #allocation1 [shape = 'u32[144,128]{1,0:T(1,128)}', space=vmem, size = 0x12000, scoped, tag = 'internal scratch']
  %s0 = inlined_call_operand.hbm [shape: f32[2,8,32], index: 0, kind: input, shape index: {}]
  %s1 = inlined_call_operand.hbm [shape: f32[8,8], index: 1, kind: input, shape index: {}]
  %s2 = inlined_call_operand.hbm [shape: f32[32,128], index: 2, kind: input, shape index: {}]
  %s3 = inlined_call_operand.vmem [shape: f32[1,128], index: 3, kind: input, shape index: {}]
  %s4 = inlined_call_operand.hbm [shape: f32[2,8,128], index: 4, kind: output, shape index: {}]
  %s5 = sld [smem:[#allocation0]]
  $region61: #{tpu_custom_call.1} parent=0
    _
  %s7 = ssub.s32 1, %s5
  %s8 = scalar_select 0, %s7, %s5
  $region1: #{tpu_custom_call.1} parent=0
    #allocation2 [shape = 'u8[8192]{0}', space=vmem, size = 0x2000, scoped, tag = 'input window, operand 0']
    #allocation3 [shape = 's32[2]{0}', space=sflag, size = 0x8, scoped, tag = 'scoped memory for tpu_custom_call.1']
    #allocation4 [shape = 's32[2]{0}', space=sflag, size = 0x8, scoped, tag = 'scoped memory for tpu_custom_call.1']
    #allocation5 [shape = 'u8[4096]{0}', space=vmem, size = 0x1000, scoped, tag = 'input window, operand 1, single buffered']
    #allocation6 [shape = 's32[1]{0}', space=sflag, size = 0x4, scoped, tag = 'scoped memory for tpu_custom_call.1']
    #allocation7 [shape = 'u8[16384]{0}', space=vmem, size = 0x4000, scoped, tag = 'input window, operand 2, single buffered']
    #allocation8 [shape = 'u8[8192]{0}', space=vmem, size = 0x2000, scoped, tag = 'output window, operand 0']
    %9 = vsyncpa [#allocation3], 0
    %s10 = scalar_lea.sflag [#allocation3], 1
    %11 = vsyncpa %s10, 0
    %12 = vsyncpa [#allocation6], 0
    %13 = vsyncpa [#allocation4], 0
    %s14 = scalar_lea.sflag [#allocation4], 1
    %15 = vsyncpa %s14, 0
    loop: start=0, step=1, limit=4
    $region2: #{tpu_custom_call.1} parent=1 // loop_pre_header
      _
    $region3: #{tpu_custom_call.1} parent=1 // loop_header
      %s17 = sphi 0, %s21
      %p18 = scmp.ge.s32.totalorder %s17, 4
      %s27 = sphi 0, %s29
      %s30 = sphi 0, %s27
      %s31 = sphi 0, %s30
      %s47 = sphi 0, %s31
      %s51 = sphi 0, %s51
      %s53 = sphi 0, %s51
      %s54 = sphi 0, %s53
      %s68 = sphi 0, %s54
      %s72 = sphi 0, %s72
      %s74 = sphi 0, %s72
      %s75 = sphi 0, %s74
      %s89 = sphi 0, %s75
      %s93 = sphi 0, %s93
      %s95 = sphi 0, %s93
      %s96 = sphi 0, %s95
      %s110 = sphi 0, %s96
      %s116 = sphi 0, %s118
      %s119 = sphi 0, %s116
      %s120 = sphi 0, %s119
      %s136 = sphi 0, %s120
    $region4: #{tpu_custom_call.1} parent=1 // loop_header_branch
      %20 = sbr.rel (%p18) target = $region8
    $region5: #{tpu_custom_call.1} parent=1 // loop_body
      %s22 = ssub.s32 %s17, 1
      %s23 = ssub.s32 %s17, 2
      %s24 = sadd.s32 %s17, 1
      %s25 = ssub.s32 %s17, %s24
      %p26 = scmp.eq.s32.totalorder %s25, 0
      %s28 = sadd.s32 %s27, 1
      %s29 = scalar_select %p26, %s27, %s28
      %p32 = pneg %p26
      %p33 = scmp.eq.s32.totalorder %s17, 1
      %p34 = por %p32, %p33
      %p35 = scmp.ne.s32.totalorder %s27, %s30
      %p36 = scmp.eq.s32.totalorder %s17, 0
      %p37 = por %p35, %p36
      %p38 = scmp.ne.s32.totalorder %s27, %s30
      %p39 = scmp.eq.s32.totalorder %s22, 1
      %p40 = por %p38, %p39
      %p41 = scmp.ne.s32.totalorder %s30, %s31
      %p42 = scmp.eq.s32.totalorder %s22, 0
      %p43 = por %p41, %p42
      %p44 = scmp.ne.s32.totalorder %s30, %s31
      %p45 = scmp.eq.s32.totalorder %s23, 1
      %p46 = por %p44, %p45
      %p48 = scmp.ne.s32.totalorder %s31, %s47
      %p49 = scmp.eq.s32.totalorder %s23, 0
      %p50 = por %p48, %p49
      %s52 = sadd.s32 %s51, 1
      %p55 = scmp.eq.s32.totalorder %s17, 1
      %p56 = scmp.ne.s32.totalorder %s51, %s53
      %p57 = scmp.eq.s32.totalorder %s17, 0
      %p58 = por %p56, %p57
      %p59 = scmp.ne.s32.totalorder %s51, %s53
      %p60 = scmp.eq.s32.totalorder %s22, 1
      %p61 = por %p59, %p60
      %p62 = scmp.ne.s32.totalorder %s53, %s54
      %p63 = scmp.eq.s32.totalorder %s22, 0
      %p64 = por %p62, %p63
      %p65 = scmp.ne.s32.totalorder %s53, %s54
      %p66 = scmp.eq.s32.totalorder %s23, 1
      %p67 = por %p65, %p66
      %p69 = scmp.ne.s32.totalorder %s54, %s68
      %p70 = scmp.eq.s32.totalorder %s23, 0
      %p71 = por %p69, %p70
      %s73 = sadd.s32 %s72, 1
      %p76 = scmp.eq.s32.totalorder %s17, 1
      %p77 = scmp.ne.s32.totalorder %s72, %s74
      %p78 = scmp.eq.s32.totalorder %s17, 0
      %p79 = por %p77, %p78
      %p80 = scmp.ne.s32.totalorder %s72, %s74
      %p81 = scmp.eq.s32.totalorder %s22, 1
      %p82 = por %p80, %p81
      %p83 = scmp.ne.s32.totalorder %s74, %s75
      %p84 = scmp.eq.s32.totalorder %s22, 0
      %p85 = por %p83, %p84
      %p86 = scmp.ne.s32.totalorder %s74, %s75
      %p87 = scmp.eq.s32.totalorder %s23, 1
      %p88 = por %p86, %p87
      %p90 = scmp.ne.s32.totalorder %s75, %s89
      %p91 = scmp.eq.s32.totalorder %s23, 0
      %p92 = por %p90, %p91
      %s94 = sadd.s32 %s93, 1
      %p97 = scmp.eq.s32.totalorder %s17, 1
      %p98 = scmp.ne.s32.totalorder %s93, %s95
      %p99 = scmp.eq.s32.totalorder %s17, 0
      %p100 = por %p98, %p99
      %p101 = scmp.ne.s32.totalorder %s93, %s95
      %p102 = scmp.eq.s32.totalorder %s22, 1
      %p103 = por %p101, %p102
      %p104 = scmp.ne.s32.totalorder %s95, %s96
      %p105 = scmp.eq.s32.totalorder %s22, 0
      %p106 = por %p104, %p105
      %p107 = scmp.ne.s32.totalorder %s95, %s96
      %p108 = scmp.eq.s32.totalorder %s23, 1
      %p109 = por %p107, %p108
      %p111 = scmp.ne.s32.totalorder %s96, %s110
      %p112 = scmp.eq.s32.totalorder %s23, 0
      %p113 = por %p111, %p112
      %s114 = ssub.s32 %s17, %s24
      %p115 = scmp.eq.s32.totalorder %s114, 0
      %s117 = sadd.s32 %s116, 1
      %s118 = scalar_select %p115, %s116, %s117
      %p121 = pneg %p115
      %p122 = scmp.eq.s32.totalorder %s17, 1
      %p123 = por %p121, %p122
      %p124 = scmp.ne.s32.totalorder %s116, %s119
      %p125 = scmp.eq.s32.totalorder %s17, 0
      %p126 = por %p124, %p125
      %p127 = scmp.ne.s32.totalorder %s116, %s119
      %p128 = scmp.eq.s32.totalorder %s22, 1
      %p129 = por %p127, %p128
      %p130 = scmp.ne.s32.totalorder %s119, %s120
      %p131 = scmp.eq.s32.totalorder %s22, 0
      %p132 = por %p130, %p131
      %p133 = scmp.ne.s32.totalorder %s119, %s120
      %p134 = scmp.eq.s32.totalorder %s23, 1
      %p135 = por %p133, %p134
      %p137 = scmp.ne.s32.totalorder %s120, %s136
      %p138 = scmp.eq.s32.totalorder %s23, 0
      %p139 = por %p137, %p138
      %p140 = scmp.le.s32.totalorder 1, %s17
      %p141 = scmp.lt.s32.totalorder %s17, 3
      %p142 = pnand %p140, %p141
      %p143 = pneg %p142
      // Predicated region
      $region9: #{tpu_custom_call.1} parent=5 // pred_check
        _
      $region10: #{tpu_custom_call.1} parent=5 // pred_check_branch
        %145 = sbr.rel (%p142) target = $region12
      $region11: #{tpu_custom_call.1} parent=5 // pred_region
        %s146 = ssub.s32 %s17, 1
        // Predicated region
        $region13: #{tpu_custom_call.1} parent=11 // pred_check
          %p147 = pneg %p64
        $region14: #{tpu_custom_call.1} parent=11 // pred_check_branch
          %149 = sbr.rel (%p147) target = $region16
        $region15: #{tpu_custom_call.1} parent=11 // pred_region
          %s151 = ssub.s32 128, 128
          %152 = vsyncadd [#allocation6], %s151
          %s154 = sshll.u32 [#allocation5], 4
          %s155 = int_to_ptr.vmem [resolvable:$true] %s154
          %157 = dma.hbm_to_vmem [thread:$0]  %s1, 128, %s155, [#allocation6]
        $region16: #{tpu_custom_call.1} parent=11 // pred_fallthru
          _
        // Predicated region
        $region17: #{tpu_custom_call.1} parent=11 // pred_check
          %p158 = pneg %p85
        $region18: #{tpu_custom_call.1} parent=11 // pred_check_branch
          %160 = sbr.rel (%p158) target = $region20
        $region19: #{tpu_custom_call.1} parent=11 // pred_region
          %s162 = ssub.s32 512, 512
          %163 = vsyncadd [#allocation6], %s162
          %s164 = sshll.u32 [#allocation7], 4
          %s165 = int_to_ptr.vmem [resolvable:$true] %s164
          %170 = dma.hbm_to_vmem [thread:$0]  %s2, 512, %s165, [#allocation6], 128, 128, 8
        $region20: #{tpu_custom_call.1} parent=11 // pred_fallthru
          _
        // Predicated region
        $region21: #{tpu_custom_call.1} parent=11 // pred_check
          %p171 = pneg %p106
        $region22: #{tpu_custom_call.1} parent=11 // pred_check_branch
          %173 = sbr.rel (%p171) target = $region24
        $region23: #{tpu_custom_call.1} parent=11 // pred_region
          _
        $region24: #{tpu_custom_call.1} parent=11 // pred_fallthru
          _
      $region12: #{tpu_custom_call.1} parent=5 // pred_fallthru
        _
      %p174 = scmp.lt.s32.totalorder %s17, 2
      // Predicated region
      $region25: #{tpu_custom_call.1} parent=5 // pred_check
        %p175 = pneg %p174
      $region26: #{tpu_custom_call.1} parent=5 // pred_check_branch
        %177 = sbr.rel (%p175) target = $region28
      $region27: #{tpu_custom_call.1} parent=5 // pred_region
        // Predicated region
        $region29: #{tpu_custom_call.1} parent=27 // pred_check
          %p178 = pneg %p37
        $region30: #{tpu_custom_call.1} parent=27 // pred_check_branch
          %180 = sbr.rel (%p178) target = $region32
        $region31: #{tpu_custom_call.1} parent=27 // pred_region
          %s181 = sand.u32 %s27, 1
          %s182 = scalar_lea.sflag [#allocation3], %s181
          %s183 = sand.u32 %s27, 1
          %s184 = smul.addr %s183, 8
          %s185 = scalar_lea.vmem [#allocation2], %s184
          %s187 = ssub.s32 128, 128
          %188 = vsyncadd %s182, %s187
          %s189 = smul.addr %s17, 128
          %s190 = scalar_lea.hbm %s0, %s189
          %s192 = sshll.u32 %s185, 4
          %s193 = int_to_ptr.vmem [resolvable:$true] %s192
          %195 = dma.hbm_to_vmem [thread:$0]  %s190, 128, %s193, %s182
        $region32: #{tpu_custom_call.1} parent=27 // pred_fallthru
          _
      $region28: #{tpu_custom_call.1} parent=5 // pred_fallthru
        _
      %p196 = scmp.le.s32.totalorder 1, %s17
      %p197 = scmp.lt.s32.totalorder %s17, 3
      %p198 = pnand %p196, %p197
      %p199 = pneg %p198
      // Predicated region
      $region33: #{tpu_custom_call.1} parent=5 // pred_check
        _
      $region34: #{tpu_custom_call.1} parent=5 // pred_check_branch
        %201 = sbr.rel (%p198) target = $region36
      $region35: #{tpu_custom_call.1} parent=5 // pred_region
        %s202 = ssub.s32 %s17, 1
        %s203 = sand.u32 %s30, 1
        %s204 = scalar_lea.sflag [#allocation3], %s203
        %s205 = sand.u32 %s30, 1
        %s206 = smul.addr %s205, 8
        %s207 = scalar_lea.vmem [#allocation2], %s206
        // Predicated region
        $region37: #{tpu_custom_call.1} parent=35 // pred_check
          %p208 = pneg %p43
        $region38: #{tpu_custom_call.1} parent=35 // pred_check_branch
          %210 = sbr.rel (%p208) target = $region40
        $region39: #{tpu_custom_call.1} parent=35 // pred_region
          %211 = dma.done %s204, 128
        $region40: #{tpu_custom_call.1} parent=35 // pred_fallthru
          _
        // Predicated region
        $region41: #{tpu_custom_call.1} parent=35 // pred_check
          %p212 = pneg %p64
        $region42: #{tpu_custom_call.1} parent=35 // pred_check_branch
          %214 = sbr.rel (%p212) target = $region44
        $region43: #{tpu_custom_call.1} parent=35 // pred_region
          %215 = dma.done [#allocation6], 128
        $region44: #{tpu_custom_call.1} parent=35 // pred_fallthru
          _
        // Predicated region
        $region45: #{tpu_custom_call.1} parent=35 // pred_check
          %p216 = pneg %p85
        $region46: #{tpu_custom_call.1} parent=35 // pred_check_branch
          %218 = sbr.rel (%p216) target = $region48
        $region47: #{tpu_custom_call.1} parent=35 // pred_region
          %219 = dma.done [#allocation6], 512
        $region48: #{tpu_custom_call.1} parent=35 // pred_fallthru
          _
        %s220 = sand.u32 %s30, 1
        %s221 = scalar_lea.sflag [#allocation3], %s220
        %s222 = sand.u32 %s30, 1
        %s223 = smul.addr %s222, 8
        %s224 = scalar_lea.vmem [#allocation2], %s223
        %p225 = pneg %p43
        %p226 = pneg %p40
        %p227 = pneg %p64
        %p228 = pneg %p61
        %p229 = pneg %p85
        %p230 = pneg %p82
        %p231 = pneg %p106
        %p232 = pneg %p103
        %p233 = pneg %p132
        %p234 = pneg %p129
        %s235 = sand.u32 %s119, 1
        %s236 = scalar_lea.sflag [#allocation4], %s235
        %s237 = sand.u32 %s119, 1
        %s238 = smul.addr %s237, 8
        %s239 = scalar_lea.vmem [#allocation8], %s238
        %v240 = vld [vmem:[#allocation5] sm:$0xff]
        %v241 = vld [vmem:[#allocation7] sm:$0xff]
        %v242 = vld [vmem:[#allocation7 + $0x8] sm:$0xff]
        %v243 = vld [vmem:[#allocation7 + $0x10] sm:$0xff]
        %v244 = vld [vmem:[#allocation7 + $0x18] sm:$0xff]
        %v245 = vld [vmem:[%s3] sm:$0x1]
        %v247 = vlaneseq
        %v248 = vshrl.u32 %v247, 7
        %v249 = vsub.s32 0, %v248
        %v250 = vrot.slane %v245, %v249
        %v252 = vld [vmem:[%s207] sm:$0xff]
        %vm253 = vcmask 64512
        %v255 = vsel %vm253, %v240, 0
        %257 = vmatprep.subr.mxu0 0.0
        %258 = vmatpush1.msra.mxu0 %v252
        %259 = vmatprep.subr.mxu0 0.0
        %260 = vmatpush1.msra.mxu0 0.0
        %261 = vmatprep.subr.mxu0 0.0
        %262 = vmatpush1.msra.mxu0 0.0
        %263 = vmatprep.subr.mxu0 0.0
        %264 = vmatpush1.msra.mxu0 0.0
        %265 = vmatprep.subr.mxu0 0.0
        %266 = vmatpush1.msra.mxu0 0.0
        %267 = vmatprep.subr.mxu0 0.0
        %268 = vmatpush1.msra.mxu0 0.0
        %269 = vmatprep.subr.mxu0 0.0
        %270 = vmatpush1.msra.mxu0 0.0
        %271 = vmatprep.subr.mxu0 0.0
        %272 = vmatpush1.msra.mxu0 0.0
        %273 = vmatprep.subr.mxu0 0.0
        %274 = vmatpush1.msra.mxu0 0.0
        %275 = vmatprep.subr.mxu0 0.0
        %276 = vmatpush1.msra.mxu0 0.0
        %277 = vmatprep.subr.mxu0 0.0
        %278 = vmatpush1.msra.mxu0 0.0
        %279 = vmatprep.subr.mxu0 0.0
        %280 = vmatpush1.msra.mxu0 0.0
        %281 = vmatprep.subr.mxu0 0.0
        %282 = vmatpush1.msra.mxu0 0.0
        %283 = vmatprep.subr.mxu0 0.0
        %284 = vmatpush1.msra.mxu0 0.0
        %285 = vmatprep.subr.mxu0 0.0
        %286 = vmatpush1.msra.mxu0 0.0
        %287 = vmatprep.subr.mxu0 0.0
        %288 = vmatpush1.msra.mxu0 0.0
        %289 = vmatprep.subr.mxu0 0.0
        %290 = vmatpush1.msra.mxu0 0.0
        %291 = vmatprep.subr.mxu0 0.0
        %292 = vmatpush1.msra.mxu0 0.0
        %293 = vmatprep.subr.mxu0 0.0
        %294 = vmatpush1.msra.mxu0 0.0
        %295 = vmatprep.subr.mxu0 0.0
        %296 = vmatpush1.msra.mxu0 0.0
        %297 = vmatprep.subr.mxu0 0.0
        %298 = vmatpush1.msra.mxu0 0.0
        %299 = vmatprep.subr.mxu0 0.0
        %300 = vmatpush1.msra.mxu0 0.0
        %301 = vmatprep.subr.mxu0 0.0
        %302 = vmatpush1.msra.mxu0 0.0
        %303 = vmatprep.subr.mxu0 0.0
        %304 = vmatpush1.msra.mxu0 0.0
        %305 = vmatprep.subr.mxu0 0.0
        %306 = vmatpush1.msra.mxu0 0.0
        %307 = vmatprep.subr.mxu0 0.0
        %308 = vmatpush1.msra.mxu0 0.0
        %309 = vmatprep.subr.mxu0 0.0
        %310 = vmatpush1.msra.mxu0 0.0
        %311 = vmatprep.subr.mxu0 0.0
        %312 = vmatpush1.msra.mxu0 0.0
        %313 = vmatprep.subr.mxu0 0.0
        %314 = vmatpush1.msra.mxu0 0.0
        %315 = vmatprep.subr.mxu0 0.0
        %316 = vmatpush1.msra.mxu0 0.0
        %317 = vmatprep.subr.mxu0 0.0
        %318 = vmatpush1.msra.mxu0 0.0
        %319 = vmatprep.subr.mxu0 0.0
        %320 = vmatpush1.msra.mxu0 0.0
        %321 = vmatprep.mubr.f32.mxu0 0.0
        %322 = vmatmul.mubr.f32.gmra.mrb[0].mxu0 %v255
        %v323 = vpop.f32.mrb[0].mxu0
        %v324 = vadd.f32 0.0, %v323
        %v325 = vpop.f32.mrb[0].mxu0
        %326 = vdwg.mxu0
        %vm327 = vcmask 261120
        %v329 = vsel %vm327, %v324, 0
        %331 = vmatprep.subr.mxu0 0.0
        %332 = vmatpush1.msra.mxu0 %v241
        %333 = vmatprep.subr.mxu0 0.0
        %334 = vmatpush1.msra.mxu0 %v242
        %335 = vmatprep.subr.mxu0 0.0
        %336 = vmatpush1.msra.mxu0 %v243
        %337 = vmatprep.subr.mxu0 0.0
        %338 = vmatpush1.msra.mxu0 %v244
        %339 = vmatprep.subr.mxu0 0.0
        %340 = vmatpush1.msra.mxu0 0.0
        %341 = vmatprep.subr.mxu0 0.0
        %342 = vmatpush1.msra.mxu0 0.0
        %343 = vmatprep.subr.mxu0 0.0
        %344 = vmatpush1.msra.mxu0 0.0
        %345 = vmatprep.subr.mxu0 0.0
        %346 = vmatpush1.msra.mxu0 0.0
        %347 = vmatprep.subr.mxu0 0.0
        %348 = vmatpush1.msra.mxu0 0.0
        %349 = vmatprep.subr.mxu0 0.0
        %350 = vmatpush1.msra.mxu0 0.0
        %351 = vmatprep.subr.mxu0 0.0
        %352 = vmatpush1.msra.mxu0 0.0
        %353 = vmatprep.subr.mxu0 0.0
        %354 = vmatpush1.msra.mxu0 0.0
        %355 = vmatprep.subr.mxu0 0.0
        %356 = vmatpush1.msra.mxu0 0.0
        %357 = vmatprep.subr.mxu0 0.0
        %358 = vmatpush1.msra.mxu0 0.0
        %359 = vmatprep.subr.mxu0 0.0
        %360 = vmatpush1.msra.mxu0 0.0
        %361 = vmatprep.subr.mxu0 0.0
        %362 = vmatpush1.msra.mxu0 0.0
        %363 = vmatprep.subr.mxu0 0.0
        %364 = vmatpush1.msra.mxu0 0.0
        %365 = vmatprep.subr.mxu0 0.0
        %366 = vmatpush1.msra.mxu0 0.0
        %367 = vmatprep.subr.mxu0 0.0
        %368 = vmatpush1.msra.mxu0 0.0
        %369 = vmatprep.subr.mxu0 0.0
        %370 = vmatpush1.msra.mxu0 0.0
        %371 = vmatprep.subr.mxu0 0.0
        %372 = vmatpush1.msra.mxu0 0.0
        %373 = vmatprep.subr.mxu0 0.0
        %374 = vmatpush1.msra.mxu0 0.0
        %375 = vmatprep.subr.mxu0 0.0
        %376 = vmatpush1.msra.mxu0 0.0
        %377 = vmatprep.subr.mxu0 0.0
        %378 = vmatpush1.msra.mxu0 0.0
        %379 = vmatprep.subr.mxu0 0.0
        %380 = vmatpush1.msra.mxu0 0.0
        %381 = vmatprep.subr.mxu0 0.0
        %382 = vmatpush1.msra.mxu0 0.0
        %383 = vmatprep.subr.mxu0 0.0
        %384 = vmatpush1.msra.mxu0 0.0
        %385 = vmatprep.subr.mxu0 0.0
        %386 = vmatpush1.msra.mxu0 0.0
        %387 = vmatprep.subr.mxu0 0.0
        %388 = vmatpush1.msra.mxu0 0.0
        %389 = vmatprep.subr.mxu0 0.0
        %390 = vmatpush1.msra.mxu0 0.0
        %391 = vmatprep.subr.mxu0 0.0
        %392 = vmatpush1.msra.mxu0 0.0
        %393 = vmatprep.subr.mxu0 0.0
        %394 = vmatpush1.msra.mxu0 0.0
        %395 = vmatprep.mubr.f32.mxu0 0.0
        %396 = vmatmul.mubr.f32.gmra.mrb[0].mxu0 %v329
        %v397 = vpop.f32.mrb[0].mxu0
        %v398 = vadd.f32 %v250, %v397
        %v399 = vpop.f32.mrb[0].mxu0
        %400 = vdwg.mxu0
        %v401 = vmax.f32 %v398, 0.0
        %402 = vst [vmem:[%s239] sm:$0xff] %v401
        %s403 = sand.u32 %s119, 1
        %s404 = scalar_lea.sflag [#allocation4], %s403
        %s405 = sand.u32 %s119, 1
        %s406 = smul.addr %s405, 8
        %s407 = scalar_lea.vmem [#allocation8], %s406
        // Predicated region
        $region49: #{tpu_custom_call.1} parent=35 // pred_check
          %p408 = pneg %p129
        $region50: #{tpu_custom_call.1} parent=35 // pred_check_branch
          %410 = sbr.rel (%p408) target = $region52
        $region51: #{tpu_custom_call.1} parent=35 // pred_region
          %s412 = ssub.s32 128, 128
          %413 = vsyncadd %s404, %s412
          %s414 = smul.addr %s22, 128
          %s415 = scalar_lea.hbm %s4, %s414
          %s417 = sshll.u32 %s407, 4
          %s418 = int_to_ptr.vmem [resolvable:$true] %s417
          %420 = dma.vmem_to_hbm [thread:$0]  %s418, 128, %s415, %s404
        $region52: #{tpu_custom_call.1} parent=35 // pred_fallthru
          _
      $region36: #{tpu_custom_call.1} parent=5 // pred_fallthru
        _
      %p421 = scmp.le.s32.totalorder 2, %s17
      // Predicated region
      $region53: #{tpu_custom_call.1} parent=5 // pred_check
        %p422 = pneg %p421
      $region54: #{tpu_custom_call.1} parent=5 // pred_check_branch
        %424 = sbr.rel (%p422) target = $region56
      $region55: #{tpu_custom_call.1} parent=5 // pred_region
        %s425 = ssub.s32 %s17, 2
        // Predicated region
        $region57: #{tpu_custom_call.1} parent=55 // pred_check
          %p426 = pneg %p135
        $region58: #{tpu_custom_call.1} parent=55 // pred_check_branch
          %428 = sbr.rel (%p426) target = $region60
        $region59: #{tpu_custom_call.1} parent=55 // pred_region
          %s429 = sand.u32 %s120, 1
          %s430 = scalar_lea.sflag [#allocation4], %s429
          %s431 = sand.u32 %s120, 1
          %s432 = smul.addr %s431, 8
          %s433 = scalar_lea.vmem [#allocation8], %s432
          %434 = dma.done %s430, 128
        $region60: #{tpu_custom_call.1} parent=55 // pred_fallthru
          _
      $region56: #{tpu_custom_call.1} parent=5 // pred_fallthru
        _
    $region6: #{tpu_custom_call.1} parent=1 // loop_footer
      %s21 = sadd.s32 1, %s17
    $region7: #{tpu_custom_call.1} parent=1 // loop_footer_branch
      %16 = sbr.rel target = $region3
    $region8: #{tpu_custom_call.1} parent=1 // loop_exit
      _
    %435 = vsyncpa [#allocation3], 1
    %s436 = scalar_lea.sflag [#allocation3], 1
    %437 = vsyncpa %s436, 1
    %438 = vsyncpa [#allocation6], 1
    %439 = vsyncpa [#allocation4], 1
    %s440 = scalar_lea.sflag [#allocation4], 1
    %441 = vsyncpa %s440, 1

// kernel: tpu_custom_call.1
$region0: #{tpu_custom_call.1}
  #allocation0 [shape = 'u32[]', space=smem, size = 0x4, offset = 0x4, fixed_abs, tag = 'smem constant byte address 0x4 - core index']
  #allocation1 [shape = 'u32[144,128]{1,0:T(1,128)}', space=vmem, size = 0x12000, scoped, tag = 'internal scratch']
  %s0 = inlined_call_operand.hbm [shape: f32[2,8,32], index: 0, kind: input, shape index: {}]
  %s1 = inlined_call_operand.hbm [shape: f32[8,8], index: 1, kind: input, shape index: {}]
  %s2 = inlined_call_operand.hbm [shape: f32[32,128], index: 2, kind: input, shape index: {}]
  %s3 = inlined_call_operand.vmem [shape: f32[1,128], index: 3, kind: input, shape index: {}]
  %s4 = inlined_call_operand.hbm [shape: f32[2,8,128], index: 4, kind: output, shape index: {}]
  %s5 = sld [smem:[#allocation0]]
  $region61: #{tpu_custom_call.1} parent=0
    _
  %s7 = ssub.s32 1, %s5
  %s8 = scalar_select 0, %s7, %s5
  $region1: #{tpu_custom_call.1} parent=0
    #allocation2 [shape = 'u8[8192]{0}', space=vmem, size = 0x2000, scoped, tag = 'input window, operand 0']
    #allocation3 [shape = 's32[2]{0}', space=sflag, size = 0x8, scoped, tag = 'scoped memory for tpu_custom_call.1']
    #allocation4 [shape = 's32[2]{0}', space=sflag, size = 0x8, scoped, tag = 'scoped memory for tpu_custom_call.1']
    #allocation5 [shape = 'u8[4096]{0}', space=vmem, size = 0x1000, scoped, tag = 'input window, operand 1, single buffered']
    #allocation6 [shape = 's32[1]{0}', space=sflag, size = 0x4, scoped, tag = 'scoped memory for tpu_custom_call.1']
    #allocation7 [shape = 'u8[16384]{0}', space=vmem, size = 0x4000, scoped, tag = 'input window, operand 2, single buffered']
    #allocation8 [shape = 'u8[8192]{0}', space=vmem, size = 0x2000, scoped, tag = 'output window, operand 0']
    %9 = vsyncpa [#allocation3], 0
    %s10 = scalar_lea.sflag [#allocation3], 1
    %11 = vsyncpa %s10, 0
    %12 = vsyncpa [#allocation6], 0
    %13 = vsyncpa [#allocation4], 0
    %s14 = scalar_lea.sflag [#allocation4], 1
    %15 = vsyncpa %s14, 0
    loop: start=0, step=1, limit=4
    $region2: #{tpu_custom_call.1} parent=1 // loop_pre_header
      _
    $region3: #{tpu_custom_call.1} parent=1 // loop_header
      %s17 = sphi 0, %s21
      %p18 = scmp.ge.s32.totalorder %s17, 4
      %s27 = sphi 0, %s29
      %s30 = sphi 0, %s27
      %s31 = sphi 0, %s30
      %s47 = sphi 0, %s31
      %s51 = sphi 0, %s51
      %s53 = sphi 0, %s51
      %s54 = sphi 0, %s53
      %s68 = sphi 0, %s54
      %s72 = sphi 0, %s72
      %s74 = sphi 0, %s72
      %s75 = sphi 0, %s74
      %s89 = sphi 0, %s75
      %s93 = sphi 0, %s93
      %s95 = sphi 0, %s93
      %s96 = sphi 0, %s95
      %s110 = sphi 0, %s96
      %s116 = sphi 0, %s118
      %s119 = sphi 0, %s116
      %s120 = sphi 0, %s119
      %s136 = sphi 0, %s120
    $region4: #{tpu_custom_call.1} parent=1 // loop_header_branch
      %20 = sbr.rel (%p18) target = $region8
    $region5: #{tpu_custom_call.1} parent=1 // loop_body
      %s22 = ssub.s32 %s17, 1
      %s23 = ssub.s32 %s17, 2
      %s24 = sadd.s32 %s17, 1
      %s25 = ssub.s32 %s17, %s24
      %p26 = scmp.eq.s32.totalorder %s25, 0
      %s28 = sadd.s32 %s27, 1
      %s29 = scalar_select %p26, %s27, %s28
      %p32 = pneg %p26
      %p33 = scmp.eq.s32.totalorder %s17, 1
      %p34 = por %p32, %p33
      %p35 = scmp.ne.s32.totalorder %s27, %s30
      %p36 = scmp.eq.s32.totalorder %s17, 0
      %p37 = por %p35, %p36
      %p38 = scmp.ne.s32.totalorder %s27, %s30
      %p39 = scmp.eq.s32.totalorder %s22, 1
      %p40 = por %p38, %p39
      %p41 = scmp.ne.s32.totalorder %s30, %s31
      %p42 = scmp.eq.s32.totalorder %s22, 0
      %p43 = por %p41, %p42
      %p44 = scmp.ne.s32.totalorder %s30, %s31
      %p45 = scmp.eq.s32.totalorder %s23, 1
      %p46 = por %p44, %p45
      %p48 = scmp.ne.s32.totalorder %s31, %s47
      %p49 = scmp.eq.s32.totalorder %s23, 0
      %p50 = por %p48, %p49
      %s52 = sadd.s32 %s51, 1
      %p55 = scmp.eq.s32.totalorder %s17, 1
      %p56 = scmp.ne.s32.totalorder %s51, %s53
      %p57 = scmp.eq.s32.totalorder %s17, 0
      %p58 = por %p56, %p57
      %p59 = scmp.ne.s32.totalorder %s51, %s53
      %p60 = scmp.eq.s32.totalorder %s22, 1
      %p61 = por %p59, %p60
      %p62 = scmp.ne.s32.totalorder %s53, %s54
      %p63 = scmp.eq.s32.totalorder %s22, 0
      %p64 = por %p62, %p63
      %p65 = scmp.ne.s32.totalorder %s53, %s54
      %p66 = scmp.eq.s32.totalorder %s23, 1
      %p67 = por %p65, %p66
      %p69 = scmp.ne.s32.totalorder %s54, %s68
      %p70 = scmp.eq.s32.totalorder %s23, 0
      %p71 = por %p69, %p70
      %s73 = sadd.s32 %s72, 1
      %p76 = scmp.eq.s32.totalorder %s17, 1
      %p77 = scmp.ne.s32.totalorder %s72, %s74
      %p78 = scmp.eq.s32.totalorder %s17, 0
      %p79 = por %p77, %p78
      %p80 = scmp.ne.s32.totalorder %s72, %s74
      %p81 = scmp.eq.s32.totalorder %s22, 1
      %p82 = por %p80, %p81
      %p83 = scmp.ne.s32.totalorder %s74, %s75
      %p84 = scmp.eq.s32.totalorder %s22, 0
      %p85 = por %p83, %p84
      %p86 = scmp.ne.s32.totalorder %s74, %s75
      %p87 = scmp.eq.s32.totalorder %s23, 1
      %p88 = por %p86, %p87
      %p90 = scmp.ne.s32.totalorder %s75, %s89
      %p91 = scmp.eq.s32.totalorder %s23, 0
      %p92 = por %p90, %p91
      %s94 = sadd.s32 %s93, 1
      %p97 = scmp.eq.s32.totalorder %s17, 1
      %p98 = scmp.ne.s32.totalorder %s93, %s95
      %p99 = scmp.eq.s32.totalorder %s17, 0
      %p100 = por %p98, %p99
      %p101 = scmp.ne.s32.totalorder %s93, %s95
      %p102 = scmp.eq.s32.totalorder %s22, 1
      %p103 = por %p101, %p102
      %p104 = scmp.ne.s32.totalorder %s95, %s96
      %p105 = scmp.eq.s32.totalorder %s22, 0
      %p106 = por %p104, %p105
      %p107 = scmp.ne.s32.totalorder %s95, %s96
      %p108 = scmp.eq.s32.totalorder %s23, 1
      %p109 = por %p107, %p108
      %p111 = scmp.ne.s32.totalorder %s96, %s110
      %p112 = scmp.eq.s32.totalorder %s23, 0
      %p113 = por %p111, %p112
      %s114 = ssub.s32 %s17, %s24
      %p115 = scmp.eq.s32.totalorder %s114, 0
      %s117 = sadd.s32 %s116, 1
      %s118 = scalar_select %p115, %s116, %s117
      %p121 = pneg %p115
      %p122 = scmp.eq.s32.totalorder %s17, 1
      %p123 = por %p121, %p122
      %p124 = scmp.ne.s32.totalorder %s116, %s119
      %p125 = scmp.eq.s32.totalorder %s17, 0
      %p126 = por %p124, %p125
      %p127 = scmp.ne.s32.totalorder %s116, %s119
      %p128 = scmp.eq.s32.totalorder %s22, 1
      %p129 = por %p127, %p128
      %p130 = scmp.ne.s32.totalorder %s119, %s120
      %p131 = scmp.eq.s32.totalorder %s22, 0
      %p132 = por %p130, %p131
      %p133 = scmp.ne.s32.totalorder %s119, %s120
      %p134 = scmp.eq.s32.totalorder %s23, 1
      %p135 = por %p133, %p134
      %p137 = scmp.ne.s32.totalorder %s120, %s136
      %p138 = scmp.eq.s32.totalorder %s23, 0
      %p139 = por %p137, %p138
      %p140 = scmp.le.s32.totalorder 1, %s17
      %p141 = scmp.lt.s32.totalorder %s17, 3
      %p142 = pnand %p140, %p141
      %p143 = pneg %p142
      // Predicated region
      $region9: #{tpu_custom_call.1} parent=5 // pred_check
        _
      $region10: #{tpu_custom_call.1} parent=5 // pred_check_branch
        %145 = sbr.rel (%p142) target = $region12
      $region11: #{tpu_custom_call.1} parent=5 // pred_region
        %s146 = ssub.s32 %s17, 1
        // Predicated region
        $region13: #{tpu_custom_call.1} parent=11 // pred_check
          %p147 = pneg %p64
        $region14: #{tpu_custom_call.1} parent=11 // pred_check_branch
          %149 = sbr.rel (%p147) target = $region16
        $region15: #{tpu_custom_call.1} parent=11 // pred_region
          %s151 = ssub.s32 128, 128
          %152 = vsyncadd [#allocation6], %s151
          %s154 = sshll.u32 [#allocation5], 4
          %s155 = int_to_ptr.vmem [resolvable:$true] %s154
          %157 = dma.hbm_to_vmem [thread:$0]  %s1, 128, %s155, [#allocation6]
        $region16: #{tpu_custom_call.1} parent=11 // pred_fallthru
          _
        // Predicated region
        $region17: #{tpu_custom_call.1} parent=11 // pred_check
          %p158 = pneg %p85
        $region18: #{tpu_custom_call.1} parent=11 // pred_check_branch
          %160 = sbr.rel (%p158) target = $region20
        $region19: #{tpu_custom_call.1} parent=11 // pred_region
          %s162 = ssub.s32 512, 512
          %163 = vsyncadd [#allocation6], %s162
          %s164 = sshll.u32 [#allocation7], 4
          %s165 = int_to_ptr.vmem [resolvable:$true] %s164
          %170 = dma.hbm_to_vmem [thread:$0]  %s2, 512, %s165, [#allocation6], 128, 128, 8
        $region20: #{tpu_custom_call.1} parent=11 // pred_fallthru
          _
        // Predicated region
        $region21: #{tpu_custom_call.1} parent=11 // pred_check
          %p171 = pneg %p106
        $region22: #{tpu_custom_call.1} parent=11 // pred_check_branch
          %173 = sbr.rel (%p171) target = $region24
        $region23: #{tpu_custom_call.1} parent=11 // pred_region
          _
        $region24: #{tpu_custom_call.1} parent=11 // pred_fallthru
          _
      $region12: #{tpu_custom_call.1} parent=5 // pred_fallthru
        _
      %p174 = scmp.lt.s32.totalorder %s17, 2
      // Predicated region
      $region25: #{tpu_custom_call.1} parent=5 // pred_check
        %p175 = pneg %p174
      $region26: #{tpu_custom_call.1} parent=5 // pred_check_branch
        %177 = sbr.rel (%p175) target = $region28
      $region27: #{tpu_custom_call.1} parent=5 // pred_region
        // Predicated region
        $region29: #{tpu_custom_call.1} parent=27 // pred_check
          %p178 = pneg %p37
        $region30: #{tpu_custom_call.1} parent=27 // pred_check_branch
          %180 = sbr.rel (%p178) target = $region32
        $region31: #{tpu_custom_call.1} parent=27 // pred_region
          %s181 = sand.u32 %s27, 1
          %s182 = scalar_lea.sflag [#allocation3], %s181
          %s183 = sand.u32 %s27, 1
          %s184 = smul.addr %s183, 8
          %s185 = scalar_lea.vmem [#allocation2], %s184
          %s187 = ssub.s32 128, 128
          %188 = vsyncadd %s182, %s187
          %s189 = smul.addr %s17, 128
          %s190 = scalar_lea.hbm %s0, %s189
          %s192 = sshll.u32 %s185, 4
          %s193 = int_to_ptr.vmem [resolvable:$true] %s192
          %195 = dma.hbm_to_vmem [thread:$0]  %s190, 128, %s193, %s182
        $region32: #{tpu_custom_call.1} parent=27 // pred_fallthru
          _
      $region28: #{tpu_custom_call.1} parent=5 // pred_fallthru
        _
      %p196 = scmp.le.s32.totalorder 1, %s17
      %p197 = scmp.lt.s32.totalorder %s17, 3
      %p198 = pnand %p196, %p197
      %p199 = pneg %p198
      // Predicated region
      $region33: #{tpu_custom_call.1} parent=5 // pred_check
        _
      $region34: #{tpu_custom_call.1} parent=5 // pred_check_branch
        %201 = sbr.rel (%p198) target = $region36
      $region35: #{tpu_custom_call.1} parent=5 // pred_region
        %s202 = ssub.s32 %s17, 1
        %s203 = sand.u32 %s30, 1
        %s204 = scalar_lea.sflag [#allocation3], %s203
        %s205 = sand.u32 %s30, 1
        %s206 = smul.addr %s205, 8
        %s207 = scalar_lea.vmem [#allocation2], %s206
        // Predicated region
        $region37: #{tpu_custom_call.1} parent=35 // pred_check
          %p208 = pneg %p43
        $region38: #{tpu_custom_call.1} parent=35 // pred_check_branch
          %210 = sbr.rel (%p208) target = $region40
        $region39: #{tpu_custom_call.1} parent=35 // pred_region
          %211 = dma.done %s204, 128
        $region40: #{tpu_custom_call.1} parent=35 // pred_fallthru
          _
        // Predicated region
        $region41: #{tpu_custom_call.1} parent=35 // pred_check
          %p212 = pneg %p64
        $region42: #{tpu_custom_call.1} parent=35 // pred_check_branch
          %214 = sbr.rel (%p212) target = $region44
        $region43: #{tpu_custom_call.1} parent=35 // pred_region
          %215 = dma.done [#allocation6], 128
        $region44: #{tpu_custom_call.1} parent=35 // pred_fallthru
          _
        // Predicated region
        $region45: #{tpu_custom_call.1} parent=35 // pred_check
          %p216 = pneg %p85
        $region46: #{tpu_custom_call.1} parent=35 // pred_check_branch
          %218 = sbr.rel (%p216) target = $region48
        $region47: #{tpu_custom_call.1} parent=35 // pred_region
          %219 = dma.done [#allocation6], 512
        $region48: #{tpu_custom_call.1} parent=35 // pred_fallthru
          _
        %s220 = sand.u32 %s30, 1
        %s221 = scalar_lea.sflag [#allocation3], %s220
        %s222 = sand.u32 %s30, 1
        %s223 = smul.addr %s222, 8
        %s224 = scalar_lea.vmem [#allocation2], %s223
        %p225 = pneg %p43
        %p226 = pneg %p40
        %p227 = pneg %p64
        %p228 = pneg %p61
        %p229 = pneg %p85
        %p230 = pneg %p82
        %p231 = pneg %p106
        %p232 = pneg %p103
        %p233 = pneg %p132
        %p234 = pneg %p129
        %s235 = sand.u32 %s119, 1
        %s236 = scalar_lea.sflag [#allocation4], %s235
        %s237 = sand.u32 %s119, 1
        %s238 = smul.addr %s237, 8
        %s239 = scalar_lea.vmem [#allocation8], %s238
        %v240 = vld [vmem:[#allocation5] sm:$0xff]
        %v241 = vld [vmem:[#allocation7] sm:$0xff]
        %v242 = vld [vmem:[#allocation7 + $0x8] sm:$0xff]
        %v243 = vld [vmem:[#allocation7 + $0x10] sm:$0xff]
        %v244 = vld [vmem:[#allocation7 + $0x18] sm:$0xff]
        %v245 = vld [vmem:[%s3] sm:$0x1]
        %v247 = vlaneseq
        %v248 = vshrl.u32 %v247, 7
        %v249 = vsub.s32 0, %v248
        %v250 = vrot.slane %v245, %v249
        %v252 = vld [vmem:[%s207] sm:$0xff]
        %vm253 = vcmask 64512
        %v255 = vsel %vm253, %v240, 0
        %257 = vmatprep.subr.mxu0 0.0
        %258 = vmatpush1.msra.mxu0 %v252
        %259 = vmatprep.subr.mxu0 0.0
        %260 = vmatpush1.msra.mxu0 0.0
        %261 = vmatprep.subr.mxu0 0.0
        %262 = vmatpush1.msra.mxu0 0.0
        %263 = vmatprep.subr.mxu0 0.0
        %264 = vmatpush1.msra.mxu0 0.0
        %265 = vmatprep.subr.mxu0 0.0
        %266 = vmatpush1.msra.mxu0 0.0
        %267 = vmatprep.subr.mxu0 0.0
        %268 = vmatpush1.msra.mxu0 0.0
        %269 = vmatprep.subr.mxu0 0.0
        %270 = vmatpush1.msra.mxu0 0.0
        %271 = vmatprep.subr.mxu0 0.0
        %272 = vmatpush1.msra.mxu0 0.0
        %273 = vmatprep.subr.mxu0 0.0
        %274 = vmatpush1.msra.mxu0 0.0
        %275 = vmatprep.subr.mxu0 0.0
        %276 = vmatpush1.msra.mxu0 0.0
        %277 = vmatprep.subr.mxu0 0.0
        %278 = vmatpush1.msra.mxu0 0.0
        %279 = vmatprep.subr.mxu0 0.0
        %280 = vmatpush1.msra.mxu0 0.0
        %281 = vmatprep.subr.mxu0 0.0
        %282 = vmatpush1.msra.mxu0 0.0
        %283 = vmatprep.subr.mxu0 0.0
        %284 = vmatpush1.msra.mxu0 0.0
        %285 = vmatprep.subr.mxu0 0.0
        %286 = vmatpush1.msra.mxu0 0.0
        %287 = vmatprep.subr.mxu0 0.0
        %288 = vmatpush1.msra.mxu0 0.0
        %289 = vmatprep.subr.mxu0 0.0
        %290 = vmatpush1.msra.mxu0 0.0
        %291 = vmatprep.subr.mxu0 0.0
        %292 = vmatpush1.msra.mxu0 0.0
        %293 = vmatprep.subr.mxu0 0.0
        %294 = vmatpush1.msra.mxu0 0.0
        %295 = vmatprep.subr.mxu0 0.0
        %296 = vmatpush1.msra.mxu0 0.0
        %297 = vmatprep.subr.mxu0 0.0
        %298 = vmatpush1.msra.mxu0 0.0
        %299 = vmatprep.subr.mxu0 0.0
        %300 = vmatpush1.msra.mxu0 0.0
        %301 = vmatprep.subr.mxu0 0.0
        %302 = vmatpush1.msra.mxu0 0.0
        %303 = vmatprep.subr.mxu0 0.0
        %304 = vmatpush1.msra.mxu0 0.0
        %305 = vmatprep.subr.mxu0 0.0
        %306 = vmatpush1.msra.mxu0 0.0
        %307 = vmatprep.subr.mxu0 0.0
        %308 = vmatpush1.msra.mxu0 0.0
        %309 = vmatprep.subr.mxu0 0.0
        %310 = vmatpush1.msra.mxu0 0.0
        %311 = vmatprep.subr.mxu0 0.0
        %312 = vmatpush1.msra.mxu0 0.0
        %313 = vmatprep.subr.mxu0 0.0
        %314 = vmatpush1.msra.mxu0 0.0
        %315 = vmatprep.subr.mxu0 0.0
        %316 = vmatpush1.msra.mxu0 0.0
        %317 = vmatprep.subr.mxu0 0.0
        %318 = vmatpush1.msra.mxu0 0.0
        %319 = vmatprep.subr.mxu0 0.0
        %320 = vmatpush1.msra.mxu0 0.0
        %321 = vmatprep.mubr.f32.mxu0 0.0
        %322 = vmatmul.mubr.f32.gmra.mrb[0].mxu0 %v255
        %v323 = vpop.f32.mrb[0].mxu0
        %v324 = vadd.f32 0.0, %v323
        %v325 = vpop.f32.mrb[0].mxu0
        %326 = vdwg.mxu0
        %vm327 = vcmask 261120
        %v329 = vsel %vm327, %v324, 0
        %331 = vmatprep.subr.mxu0 0.0
        %332 = vmatpush1.msra.mxu0 %v241
        %333 = vmatprep.subr.mxu0 0.0
        %334 = vmatpush1.msra.mxu0 %v242
        %335 = vmatprep.subr.mxu0 0.0
        %336 = vmatpush1.msra.mxu0 %v243
        %337 = vmatprep.subr.mxu0 0.0
        %338 = vmatpush1.msra.mxu0 %v244
        %339 = vmatprep.subr.mxu0 0.0
        %340 = vmatpush1.msra.mxu0 0.0
        %341 = vmatprep.subr.mxu0 0.0
        %342 = vmatpush1.msra.mxu0 0.0
        %343 = vmatprep.subr.mxu0 0.0
        %344 = vmatpush1.msra.mxu0 0.0
        %345 = vmatprep.subr.mxu0 0.0
        %346 = vmatpush1.msra.mxu0 0.0
        %347 = vmatprep.subr.mxu0 0.0
        %348 = vmatpush1.msra.mxu0 0.0
        %349 = vmatprep.subr.mxu0 0.0
        %350 = vmatpush1.msra.mxu0 0.0
        %351 = vmatprep.subr.mxu0 0.0
        %352 = vmatpush1.msra.mxu0 0.0
        %353 = vmatprep.subr.mxu0 0.0
        %354 = vmatpush1.msra.mxu0 0.0
        %355 = vmatprep.subr.mxu0 0.0
        %356 = vmatpush1.msra.mxu0 0.0
        %357 = vmatprep.subr.mxu0 0.0
        %358 = vmatpush1.msra.mxu0 0.0
        %359 = vmatprep.subr.mxu0 0.0
        %360 = vmatpush1.msra.mxu0 0.0
        %361 = vmatprep.subr.mxu0 0.0
        %362 = vmatpush1.msra.mxu0 0.0
        %363 = vmatprep.subr.mxu0 0.0
        %364 = vmatpush1.msra.mxu0 0.0
        %365 = vmatprep.subr.mxu0 0.0
        %366 = vmatpush1.msra.mxu0 0.0
        %367 = vmatprep.subr.mxu0 0.0
        %368 = vmatpush1.msra.mxu0 0.0
        %369 = vmatprep.subr.mxu0 0.0
        %370 = vmatpush1.msra.mxu0 0.0
        %371 = vmatprep.subr.mxu0 0.0
        %372 = vmatpush1.msra.mxu0 0.0
        %373 = vmatprep.subr.mxu0 0.0
        %374 = vmatpush1.msra.mxu0 0.0
        %375 = vmatprep.subr.mxu0 0.0
        %376 = vmatpush1.msra.mxu0 0.0
        %377 = vmatprep.subr.mxu0 0.0
        %378 = vmatpush1.msra.mxu0 0.0
        %379 = vmatprep.subr.mxu0 0.0
        %380 = vmatpush1.msra.mxu0 0.0
        %381 = vmatprep.subr.mxu0 0.0
        %382 = vmatpush1.msra.mxu0 0.0
        %383 = vmatprep.subr.mxu0 0.0
        %384 = vmatpush1.msra.mxu0 0.0
        %385 = vmatprep.subr.mxu0 0.0
        %386 = vmatpush1.msra.mxu0 0.0
        %387 = vmatprep.subr.mxu0 0.0
        %388 = vmatpush1.msra.mxu0 0.0
        %389 = vmatprep.subr.mxu0 0.0
        %390 = vmatpush1.msra.mxu0 0.0
        %391 = vmatprep.subr.mxu0 0.0
        %392 = vmatpush1.msra.mxu0 0.0
        %393 = vmatprep.subr.mxu0 0.0
        %394 = vmatpush1.msra.mxu0 0.0
        %395 = vmatprep.mubr.f32.mxu0 0.0
        %396 = vmatmul.mubr.f32.gmra.mrb[0].mxu0 %v329
        %v397 = vpop.f32.mrb[0].mxu0
        %v398 = vadd.f32 %v250, %v397
        %v399 = vpop.f32.mrb[0].mxu0
        %400 = vdwg.mxu0
        %v401 = vmax.f32 %v398, 0.0
        %402 = vst [vmem:[%s239] sm:$0xff] %v401
        %s403 = sand.u32 %s119, 1
        %s404 = scalar_lea.sflag [#allocation4], %s403
        %s405 = sand.u32 %s119, 1
        %s406 = smul.addr %s405, 8
        %s407 = scalar_lea.vmem [#allocation8], %s406
        // Predicated region
        $region49: #{tpu_custom_call.1} parent=35 // pred_check
          %p408 = pneg %p129
        $region50: #{tpu_custom_call.1} parent=35 // pred_check_branch
          %410 = sbr.rel (%p408) target = $region52
        $region51: #{tpu_custom_call.1} parent=35 // pred_region
          %s412 = ssub.s32 128, 128
          %413 = vsyncadd %s404, %s412
          %s414 = smul.addr %s22, 128
          %s415 = scalar_lea.hbm %s4, %s414
          %s417 = sshll.u32 %s407, 4
          %s418 = int_to_ptr.vmem [resolvable:$true] %s417
          %420 = dma.vmem_to_hbm [thread:$0]  %s418, 128, %s415, %s404
        $region52: #{tpu_custom_call.1} parent=35 // pred_fallthru
          _
      $region36: #{tpu_custom_call.1} parent=5 // pred_fallthru
        _
      %p421 = scmp.le.s32.totalorder 2, %s17
      // Predicated region
      $region53: #{tpu_custom_call.1} parent=5 // pred_check
        %p422 = pneg %p421
      $region54: #{tpu_custom_call.1} parent=5 // pred_check_branch
        %424 = sbr.rel (%p422) target = $region56
      $region55: #{tpu_custom_call.1} parent=5 // pred_region
        %s425 = ssub.s32 %s17, 2
        // Predicated region
        $region57: #{tpu_custom_call.1} parent=55 // pred_check
          %p426 = pneg %p135
        $region58: #{tpu_custom_call.1} parent=55 // pred_check_branch
          %428 = sbr.rel (%p426) target = $region60
        $region59: #{tpu_custom_call.1} parent=55 // pred_region
          %s429 = sand.u32 %s120, 1
          %s430 = scalar_lea.sflag [#allocation4], %s429
          %s431 = sand.u32 %s120, 1
          %s432 = smul.addr %s431, 8
          %s433 = scalar_lea.vmem [#allocation8], %s432
          %434 = dma.done %s430, 128
        $region60: #{tpu_custom_call.1} parent=55 // pred_fallthru
          _
      $region56: #{tpu_custom_call.1} parent=5 // pred_fallthru
        _
    $region6: #{tpu_custom_call.1} parent=1 // loop_footer
      %s21 = sadd.s32 1, %s17
    $region7: #{tpu_custom_call.1} parent=1 // loop_footer_branch
      %16 = sbr.rel target = $region3
    $region8: #{tpu_custom_call.1} parent=1 // loop_exit
      _
    %435 = vsyncpa [#allocation3], 1
    %s436 = scalar_lea.sflag [#allocation3], 1
    %437 = vsyncpa %s436, 1
    %438 = vsyncpa [#allocation6], 1
    %439 = vsyncpa [#allocation4], 1
    %s440 = scalar_lea.sflag [#allocation4], 1
    %441 = vsyncpa %s440, 1

</llo_original>
